<compile_context>
chip_gen: v7x
topology: tpu7x:2x2x1
jax: 0.10.0
libtpu: 0.0.40
codegen_flags: <defaults>
</compile_context>

<pallas_src>
import functools

import jax
import jax.numpy as jnp
from jax.experimental import pallas as pl
from jax.experimental.pallas import tpu as pltpu

EPS = 1e-5
NEG_BIG = -1e30  # finite additive causal-mask bias (avoids -inf propagation hazards)


def _layer_norm(v, scale, shift):
    mean = jnp.mean(v, axis=-1, keepdims=True)
    var = jnp.mean((v - mean) ** 2, axis=-1, keepdims=True)  # biased var (unbiased=False)
    return (v - mean) * jax.lax.rsqrt(var + EPS) * scale + shift


def _gelu_tanh(h):
    # GELU tanh approximation used by the reference FeedForward
    return 0.5 * h * (1.0 + jnp.tanh(jnp.sqrt(2.0 / jnp.pi) * (h + 0.044715 * h * h * h)))


# --------------------------- pass 1: LN1 + per-head Q/K/V projection ---------------------------
def qkv_kernel(x_ref, s1_ref, sh1_ref, wq_ref, wk_ref, wv_ref,
               q_ref, k_ref, v_ref, *, compute_dtype):
    cd = compute_dtype
    hd = wq_ref.shape[2]
    inv_sqrt_hd = 1.0 / (hd ** 0.5)

    n1 = _layer_norm(x_ref[0].astype(jnp.float32), s1_ref[...], sh1_ref[...]).astype(cd)

    def mm(a, b):
        return jnp.dot(a, b, preferred_element_type=jnp.float32)

    q_ref[0, 0] = (mm(n1, wq_ref[0]) * inv_sqrt_hd).astype(q_ref.dtype)  # scale folded into Q
    k_ref[0, 0] = mm(n1, wk_ref[0]).astype(k_ref.dtype)
    v_ref[0, 0] = mm(n1, wv_ref[0]).astype(v_ref.dtype)


# --------------------------- pass 2: streamed causal attention + residual ---------------------------
def attn_kernel(xq_ref, q_ref, k_ref, v_ref, wo_ref, bo_ref, o_ref,
                m_sc, l_sc, ctx_sc, acc_sc, *, num_heads, compute_dtype):
    qi = pl.program_id(1)   # query tile
    h = pl.program_id(2)    # head
    ki = pl.program_id(3)   # key/value tile (innermost reduction)
    cd = compute_dtype
    tile_t = q_ref.shape[2]

    # once per (batch, q-tile): reset cross-head accumulator
    @pl.when(jnp.logical_and(h == 0, ki == 0))
    def _():
        acc_sc[...] = jnp.zeros_like(acc_sc)

    # once per head: reset online-softmax state
    @pl.when(ki == 0)
    def _():
        m_sc[...] = jnp.full_like(m_sc, -jnp.inf)
        l_sc[...] = jnp.zeros_like(l_sc)
        ctx_sc[...] = jnp.zeros_like(ctx_sc)

    def scores():
        # contract last dims of Q and K directly — no materialized transpose
        return jax.lax.dot_general(q_ref[0, 0], k_ref[0, 0],
                                   (((1,), (1,)), ((), ())),
                                   preferred_element_type=jnp.float32)

    def online_softmax_step(s):
        m_prev = m_sc[...]
        m_new = jnp.maximum(m_prev, jnp.max(s, axis=-1, keepdims=True))
        alpha = jnp.exp(m_prev - m_new)
        p = jnp.exp(s - m_new)
        l_sc[...] = alpha * l_sc[...] + jnp.sum(p, axis=-1, keepdims=True)
        ctx_sc[...] = alpha * ctx_sc[...] + jnp.dot(
            p.astype(cd), v_ref[0, 0], preferred_element_type=jnp.float32)
        m_sc[...] = m_new

    # fully-visible kv tile: no mask work at all
    @pl.when(ki < qi)
    def _():
        online_softmax_step(scores())

    # diagonal kv tile: mask, then finish this head (and the q-tile after the last head)
    @pl.when(ki == qi)
    def _():
        s = scores()
        r = jax.lax.broadcasted_iota(jnp.int32, (tile_t, tile_t), 0)
        c = jax.lax.broadcasted_iota(jnp.int32, (tile_t, tile_t), 1)
        online_softmax_step(s + jnp.where(c <= r, 0.0, NEG_BIG))

        ctx = ctx_sc[...] * pl.reciprocal(l_sc[...], approx=False)  # exact normalization
        acc_sc[...] += jnp.dot(ctx.astype(cd), wo_ref[h],
                               preferred_element_type=jnp.float32)

        @pl.when(h == num_heads - 1)
        def _():
            o_ref[0] = (xq_ref[0] + acc_sc[...] + bo_ref[...]).astype(o_ref.dtype)


# --------------------------- pass 3: residual + LN2 + FFN(GELU) + residual ---------------------------
def ffn_kernel(x1_ref, s2_ref, sh2_ref, w1_ref, b1_ref, w2_ref, b2_ref,
               o_ref, n2_sc, acc_sc, *, compute_dtype):
    cd = compute_dtype
    c = pl.program_id(2)  # Dff chunk (innermost reduction)

    @pl.when(c == 0)
    def _():
        n2 = _layer_norm(x1_ref[0].astype(jnp.float32), s2_ref[...], sh2_ref[...])
        n2_sc[...] = n2.astype(n2_sc.dtype)
        acc_sc[...] = jnp.zeros_like(acc_sc)

    hid = jnp.dot(n2_sc[...], w1_ref[...],
                  preferred_element_type=jnp.float32) + b1_ref[...]
    g = _gelu_tanh(hid)
    acc_sc[...] += jnp.dot(g.astype(cd), w2_ref[...],
                           preferred_element_type=jnp.float32)

    @pl.when(c == pl.num_programs(2) - 1)
    def _():
        o_ref[0] = (x1_ref[0] + acc_sc[...] + b2_ref[...]).astype(o_ref.dtype)


# --------------------------------------- wrapper ---------------------------------------
def _vmem_limit_bytes():
    # Cap the scoped-VMEM request at ~85% of this generation's physical VMEM (valid on v7x's
    # 64 MiB per-TC budget).  Conservative fallback when not on a TPU backend.
    try:
        cap = pltpu.get_tpu_info().vmem_capacity_bytes
    except Exception:
        cap = 64 << 20
    return int(0.85 * cap)


def _default_compute_dtype():
    # bf16 matmul inputs (f32 accumulation) on TPU; f32 elsewhere (CPU/interpret backends do
    # not support bf16 x bf16 -> f32 dots).
    try:
        if jax.devices()[0].platform == "tpu":
            return jnp.bfloat16
    except Exception:
        pass
    return jnp.float32


def transformer_block(x, params, *, num_heads, tile_t=None, dff_chunk=None, compute_dtype=None):
    B, T, D = x.shape
    Dff = params["w1"].shape[1]
    assert D % num_heads == 0
    Hd = D // num_heads

    if compute_dtype is None:
        compute_dtype = _default_compute_dtype()
    if tile_t is None:
        tile_t = min(T, 128)
    assert T % tile_t == 0 and tile_t % 8 == 0, "T must be divisible by tile_t (multiple of 8)"
    nt = T // tile_t
    if dff_chunk is None:
        dff_chunk = min(Dff, 512)
    assert Dff % dff_chunk == 0, "Dff must be divisible by dff_chunk"
    assert dff_chunk == Dff or dff_chunk % 128 == 0, "dff_chunk must be lane-aligned"
    nc = Dff // dff_chunk

    wdt = compute_dtype
    # Head-major weight layouts: each grid step DMAs only the active head's slice.
    wq_h = jnp.transpose(params["wq"].reshape(D, num_heads, Hd), (1, 0, 2)).astype(wdt)  # (H, D, Hd)
    wk_h = jnp.transpose(params["wk"].reshape(D, num_heads, Hd), (1, 0, 2)).astype(wdt)
    wv_h = jnp.transpose(params["wv"].reshape(D, num_heads, Hd), (1, 0, 2)).astype(wdt)
    wo_h = params["wo"].reshape(num_heads, Hd, D).astype(wdt)                            # (H, Hd, D)
    w1 = params["w1"].astype(wdt)
    w2 = params["w2"].astype(wdt)

    vlim = _vmem_limit_bytes()

    # ---- pass 1: LN1 + Q/K/V projection (heads on a grid axis; weights resident per (b, h)) ----
    qkv_shape = jax.ShapeDtypeStruct((B, num_heads, T, Hd), compute_dtype)
    q, k, v = pl.pallas_call(
        functools.partial(qkv_kernel, compute_dtype=compute_dtype),
        out_shape=(qkv_shape, qkv_shape, qkv_shape),
        grid_spec=pltpu.PrefetchScalarGridSpec(
            num_scalar_prefetch=0,
            grid=(B, num_heads, nt),
            in_specs=[
                pl.BlockSpec((1, tile_t, D), lambda b, h, t: (b, t, 0)),   # x tile
                pl.BlockSpec((1, D), lambda b, h, t: (0, 0)),              # ln1 scale
                pl.BlockSpec((1, D), lambda b, h, t: (0, 0)),              # ln1 shift
                pl.BlockSpec((1, D, Hd), lambda b, h, t: (h, 0, 0)),       # Wq (per head)
                pl.BlockSpec((1, D, Hd), lambda b, h, t: (h, 0, 0)),       # Wk (per head)
                pl.BlockSpec((1, D, Hd), lambda b, h, t: (h, 0, 0)),       # Wv (per head)
            ],
            out_specs=[pl.BlockSpec((1, 1, tile_t, Hd), lambda b, h, t: (b, h, t, 0))] * 3,
        ),
        compiler_params=pltpu.CompilerParams(
            dimension_semantics=("parallel", "parallel", "parallel"),
            vmem_limit_bytes=vlim,
        ),
    )(x, params["s1"], params["sh1"], wq_h, wk_h, wv_h)

    # ---- pass 2: causal flash attention, out-proj, residual ----
    x1 = pl.pallas_call(
        functools.partial(attn_kernel, num_heads=num_heads, compute_dtype=compute_dtype),
        out_shape=jax.ShapeDtypeStruct((B, T, D), x.dtype),
        grid_spec=pltpu.PrefetchScalarGridSpec(
            num_scalar_prefetch=0,
            grid=(B, nt, num_heads, nt),
            in_specs=[
                pl.BlockSpec((1, tile_t, D), lambda b, qi, h, ki: (b, qi, 0)),         # residual x
                pl.BlockSpec((1, 1, tile_t, Hd), lambda b, qi, h, ki: (b, h, qi, 0)),  # Q
                pl.BlockSpec((1, 1, tile_t, Hd),                                       # K (causal clamp)
                             lambda b, qi, h, ki: (b, h, jnp.minimum(ki, qi), 0)),
                pl.BlockSpec((1, 1, tile_t, Hd),                                       # V (causal clamp)
                             lambda b, qi, h, ki: (b, h, jnp.minimum(ki, qi), 0)),
                pl.BlockSpec((num_heads, Hd, D), lambda b, qi, h, ki: (0, 0, 0)),      # Wo (resident)
                pl.BlockSpec((1, D), lambda b, qi, h, ki: (0, 0)),                     # bo
            ],
            out_specs=pl.BlockSpec((1, tile_t, D), lambda b, qi, h, ki: (b, qi, 0)),
            scratch_shapes=[
                pltpu.VMEM((tile_t, 1), jnp.float32),    # running max
                pltpu.VMEM((tile_t, 1), jnp.float32),    # running sum
                pltpu.VMEM((tile_t, Hd), jnp.float32),   # per-head context accumulator
                pltpu.VMEM((tile_t, D), jnp.float32),    # cross-head attention accumulator
            ],
        ),
        compiler_params=pltpu.CompilerParams(
            dimension_semantics=("parallel", "parallel", "arbitrary", "arbitrary"),
            vmem_limit_bytes=vlim,
        ),
    )(x, q, k, v, wo_h, params["bo"])

    # ---- pass 3: residual + LN2 + FFN with Dff streamed on a grid axis ----
    out = pl.pallas_call(
        functools.partial(ffn_kernel, compute_dtype=compute_dtype),
        out_shape=jax.ShapeDtypeStruct((B, T, D), x.dtype),
        grid_spec=pltpu.PrefetchScalarGridSpec(
            num_scalar_prefetch=0,
            grid=(B, nt, nc),
            in_specs=[
                pl.BlockSpec((1, tile_t, D), lambda b, t, c: (b, t, 0)),   # x1 tile
                pl.BlockSpec((1, D), lambda b, t, c: (0, 0)),              # ln2 scale
                pl.BlockSpec((1, D), lambda b, t, c: (0, 0)),              # ln2 shift
                pl.BlockSpec((D, dff_chunk), lambda b, t, c: (0, c)),      # W1 chunk
                pl.BlockSpec((1, dff_chunk), lambda b, t, c: (0, c)),      # b1 chunk
                pl.BlockSpec((dff_chunk, D), lambda b, t, c: (c, 0)),      # W2 chunk
                pl.BlockSpec((1, D), lambda b, t, c: (0, 0)),              # b2
            ],
            out_specs=pl.BlockSpec((1, tile_t, D), lambda b, t, c: (b, t, 0)),
            scratch_shapes=[
                pltpu.VMEM((tile_t, D), compute_dtype),   # LN2(x1) cache
                pltpu.VMEM((tile_t, D), jnp.float32),     # FFN accumulator
            ],
        ),
        compiler_params=pltpu.CompilerParams(
            dimension_semantics=("parallel", "parallel", "arbitrary"),
            vmem_limit_bytes=vlim,
        ),
    )(x1, params["s2"], params["sh2"], w1, params["b1"], w2, params["b2"])
    return out


# ---------------- pure-JAX reference (correctness sanity check) ----------------
def reference_block(x, p, *, num_heads):
    HI = jax.lax.Precision.HIGHEST
    B, T, D = x.shape
    Hd = D // num_heads

    def ln(v, s, sh):
        m = jnp.mean(v, -1, keepdims=True)
        var = jnp.mean((v - m) ** 2, -1, keepdims=True)
        return (v - m) * jax.lax.rsqrt(var + EPS) * s + sh

    n1 = ln(x, p["s1"], p["sh1"])
    q = jnp.einsum("btd,de->bte", n1, p["wq"], precision=HI).reshape(B, T, num_heads, Hd)
    k = jnp.einsum("btd,de->bte", n1, p["wk"], precision=HI).reshape(B, T, num_heads, Hd)
    v = jnp.einsum("btd,de->bte", n1, p["wv"], precision=HI).reshape(B, T, num_heads, Hd)
    sc = jnp.einsum("bthd,bshd->bhts", q, k, precision=HI)
    mask = jnp.tril(jnp.ones((T, T), bool))
    sc = jnp.where(mask, sc, -jnp.inf) / jnp.sqrt(jnp.float32(Hd))
    w = jax.nn.softmax(sc, axis=-1)
    ctx = jnp.einsum("bhts,bshd->bthd", w, v, precision=HI).reshape(B, T, D)
    att = jnp.einsum("btd,de->bte", ctx, p["wo"], precision=HI) + p["bo"]
    x1 = x + att
    n2 = ln(x1, p["s2"], p["sh2"])
    h = jnp.einsum("btd,df->btf", n2, p["w1"], precision=HI) + p["b1"]
    g = 0.5 * h * (1.0 + jnp.tanh(jnp.sqrt(2.0 / jnp.pi) * (h + 0.044715 * h ** 3)))
    ff = jnp.einsum("btf,fd->btd", g, p["w2"], precision=HI) + p["b2"]
    return x1 + ff


if __name__ == "__main__":
    # cfg: emb_dim=64, context_length=16, n_heads=4, drop_rate=0.0, qkv_bias=False
    B, T, D, H = 2, 16, 64, 4
    Dff = 4 * D

    key = jax.random.PRNGKey(0)
    ks = jax.random.split(key, 8)
    x = jax.random.normal(ks[0], (B, T, D), jnp.float32)

    init = lambda k, shape: 0.02 * jax.random.normal(k, shape, jnp.float32)
    params = {
        "s1": jnp.ones((1, D), jnp.float32), "sh1": jnp.zeros((1, D), jnp.float32),
        "s2": jnp.ones((1, D), jnp.float32), "sh2": jnp.zeros((1, D), jnp.float32),
        "wq": init(ks[1], (D, D)), "wk": init(ks[2], (D, D)), "wv": init(ks[3], (D, D)),
        "wo": init(ks[4], (D, D)), "bo": jnp.zeros((1, D), jnp.float32),
        "w1": init(ks[5], (D, Dff)), "b1": jnp.zeros((1, Dff), jnp.float32),
        "w2": init(ks[6], (Dff, D)), "b2": jnp.zeros((1, D), jnp.float32),
    }

    ref = reference_block(x, params, num_heads=H)

    # Demo uses the f32 matmul path for a tight-tolerance correctness check (works on every
    # backend); production use defaults to bf16 matmul inputs with f32 accumulation on TPU.
    # tile_t=8 -> 2x2 (q-tile, kv-tile) causal grid; dff_chunk=128 -> 2 streamed FFN chunks.
    out = jax.block_until_ready(
        transformer_block(x, params, num_heads=H, tile_t=8, dff_chunk=128,
                          compute_dtype=jnp.float32))
    assert out.shape == (B, T, D)
    assert jnp.allclose(out, ref, atol=2e-3, rtol=2e-3), "kernel mismatch vs reference"

    print("KERNEL_OK")
</pallas_src>

<mosaic_0001>
module attributes {stable_mosaic.version = 11 : i64} {
  func.func @qkv_kernel(%arg0: i32, %arg1: i32, %arg2: i32, %arg3: memref<1x8x64xf32, #tpu.memory_space<vmem>>, %arg4: memref<1x64xf32, #tpu.memory_space<vmem>>, %arg5: memref<1x64xf32, #tpu.memory_space<vmem>>, %arg6: memref<1x64x16xf32, #tpu.memory_space<vmem>>, %arg7: memref<1x64x16xf32, #tpu.memory_space<vmem>>, %arg8: memref<1x64x16xf32, #tpu.memory_space<vmem>>, %arg9: memref<1x1x8x16xf32, #tpu.memory_space<vmem>>, %arg10: memref<1x1x8x16xf32, #tpu.memory_space<vmem>>, %arg11: memref<1x1x8x16xf32, #tpu.memory_space<vmem>>) attributes {dimension_semantics = [#tpu.dimension_semantics<parallel>, #tpu.dimension_semantics<parallel>, #tpu.dimension_semantics<parallel>], iteration_bounds = array<i64: 2, 4, 2>, scalar_prefetch = 0 : i64, scratch_operands = 0 : i64, tpu.core_type = #tpu.core_type<tc>, window_params = [{transform_indices = @transform_0, window_bounds = array<i64: 1, 8, 64>}, {pipeline_mode = #tpu.pipeline_mode<synchronous>, transform_indices = @transform_1, window_bounds = array<i64: 1, 64>}, {pipeline_mode = #tpu.pipeline_mode<synchronous>, transform_indices = @transform_2, window_bounds = array<i64: 1, 64>}, {transform_indices = @transform_3, window_bounds = array<i64: 1, 64, 16>}, {transform_indices = @transform_4, window_bounds = array<i64: 1, 64, 16>}, {transform_indices = @transform_5, window_bounds = array<i64: 1, 64, 16>}, {transform_indices = @transform_6, window_bounds = array<i64: 1, 1, 8, 16>}, {transform_indices = @transform_7, window_bounds = array<i64: 1, 1, 8, 16>}, {transform_indices = @transform_8, window_bounds = array<i64: 1, 1, 8, 16>}]} {
    %c0 = arith.constant 0 : index
    %c0_0 = arith.constant 0 : index
    %c0_1 = arith.constant 0 : index
    %0 = vector.load %arg3[%c0, %c0_0, %c0_1] : memref<1x8x64xf32, #tpu.memory_space<vmem>>, vector<1x8x64xf32>
    %1 = vector.shape_cast %0 : vector<1x8x64xf32> to vector<8x64xf32>
    %c0_2 = arith.constant 0 : index
    %c0_3 = arith.constant 0 : index
    %2 = vector.load %arg4[%c0_2, %c0_3] : memref<1x64xf32, #tpu.memory_space<vmem>>, vector<1x64xf32>
    %c0_4 = arith.constant 0 : index
    %c0_5 = arith.constant 0 : index
    %3 = vector.load %arg5[%c0_4, %c0_5] : memref<1x64xf32, #tpu.memory_space<vmem>>, vector<1x64xf32>
    %cst = arith.constant dense<0.000000e+00> : vector<8xf32>
    %4 = vector.multi_reduction <add>, %1, %cst [1] : vector<8x64xf32> to vector<8xf32>
    %5 = vector.shape_cast %4 : vector<8xf32> to vector<8x1xf32>
    %cst_6 = arith.constant 6.400000e+01 : f32
    %6 = vector.broadcast %cst_6 : f32 to vector<8x1xf32>
    %7 = arith.divf %5, %6 : vector<8x1xf32>
    %8 = vector.broadcast %7 : vector<8x1xf32> to vector<8x64xf32>
    %9 = arith.subf %1, %8 : vector<8x64xf32>
    %10 = arith.mulf %9, %9 : vector<8x64xf32>
    %cst_7 = arith.constant dense<0.000000e+00> : vector<8xf32>
    %11 = vector.multi_reduction <add>, %10, %cst_7 [1] : vector<8x64xf32> to vector<8xf32>
    %12 = vector.shape_cast %11 : vector<8xf32> to vector<8x1xf32>
    %cst_8 = arith.constant 6.400000e+01 : f32
    %13 = vector.broadcast %cst_8 : f32 to vector<8x1xf32>
    %14 = arith.divf %12, %13 : vector<8x1xf32>
    %15 = vector.broadcast %7 : vector<8x1xf32> to vector<8x64xf32>
    %16 = arith.subf %1, %15 : vector<8x64xf32>
    %cst_9 = arith.constant 9.99999974E-6 : f32
    %17 = vector.broadcast %cst_9 : f32 to vector<8x1xf32>
    %18 = arith.addf %14, %17 : vector<8x1xf32>
    %19 = math.rsqrt %18 : vector<8x1xf32>
    %20 = vector.broadcast %19 : vector<8x1xf32> to vector<8x64xf32>
    %21 = arith.mulf %16, %20 : vector<8x64xf32>
    %22 = vector.broadcast %2 : vector<1x64xf32> to vector<8x64xf32>
    %23 = arith.mulf %21, %22 : vector<8x64xf32>
    %24 = vector.broadcast %3 : vector<1x64xf32> to vector<8x64xf32>
    %25 = arith.addf %23, %24 : vector<8x64xf32>
    %c0_10 = arith.constant 0 : index
    %c0_11 = arith.constant 0 : index
    %c0_12 = arith.constant 0 : index
    %26 = vector.load %arg6[%c0_10, %c0_11, %c0_12] : memref<1x64x16xf32, #tpu.memory_space<vmem>>, vector<1x64x16xf32>
    %27 = vector.shape_cast %26 : vector<1x64x16xf32> to vector<64x16xf32>
    %cst_13 = arith.constant dense<0.000000e+00> : vector<8x16xf32>
    %28 = tpu.matmul %25, %27, %cst_13 {dimension_numbers = #tpu.dot_dimension_numbers<[1], [0], [0], [1], [0, 0, 1, 1], [], []>} : vector<8x64xf32>, vector<64x16xf32>, vector<8x16xf32> -> vector<8x16xf32>
    %cst_14 = arith.constant 2.500000e-01 : f32
    %29 = vector.broadcast %cst_14 : f32 to vector<8x16xf32>
    %30 = arith.mulf %28, %29 : vector<8x16xf32>
    %c0_15 = arith.constant 0 : index
    %c0_16 = arith.constant 0 : index
    %c0_17 = arith.constant 0 : index
    %c0_18 = arith.constant 0 : index
    %31 = vector.load %arg9[%c0_15, %c0_16, %c0_17, %c0_18] : memref<1x1x8x16xf32, #tpu.memory_space<vmem>>, vector<1x1x8x16xf32>
    %32 = vector.shape_cast %31 : vector<1x1x8x16xf32> to vector<8x16xf32>
    %33 = vector.shape_cast %30 : vector<8x16xf32> to vector<1x1x8x16xf32>
    tpu.vector_store %arg9[%c0_15, %c0_16, %c0_17, %c0_18], %33 {strides = array<i32>} : memref<1x1x8x16xf32, #tpu.memory_space<vmem>>, vector<1x1x8x16xf32>,
    %c0_19 = arith.constant 0 : index
    %c0_20 = arith.constant 0 : index
    %c0_21 = arith.constant 0 : index
    %34 = vector.load %arg7[%c0_19, %c0_20, %c0_21] : memref<1x64x16xf32, #tpu.memory_space<vmem>>, vector<1x64x16xf32>
    %35 = vector.shape_cast %34 : vector<1x64x16xf32> to vector<64x16xf32>
    %cst_22 = arith.constant dense<0.000000e+00> : vector<8x16xf32>
    %36 = tpu.matmul %25, %35, %cst_22 {dimension_numbers = #tpu.dot_dimension_numbers<[1], [0], [0], [1], [0, 0, 1, 1], [], []>} : vector<8x64xf32>, vector<64x16xf32>, vector<8x16xf32> -> vector<8x16xf32>
    %c0_23 = arith.constant 0 : index
    %c0_24 = arith.constant 0 : index
    %c0_25 = arith.constant 0 : index
    %c0_26 = arith.constant 0 : index
    %37 = vector.load %arg10[%c0_23, %c0_24, %c0_25, %c0_26] : memref<1x1x8x16xf32, #tpu.memory_space<vmem>>, vector<1x1x8x16xf32>
    %38 = vector.shape_cast %37 : vector<1x1x8x16xf32> to vector<8x16xf32>
    %39 = vector.shape_cast %36 : vector<8x16xf32> to vector<1x1x8x16xf32>
    tpu.vector_store %arg10[%c0_23, %c0_24, %c0_25, %c0_26], %39 {strides = array<i32>} : memref<1x1x8x16xf32, #tpu.memory_space<vmem>>, vector<1x1x8x16xf32>,
    %c0_27 = arith.constant 0 : index
    %c0_28 = arith.constant 0 : index
    %c0_29 = arith.constant 0 : index
    %40 = vector.load %arg8[%c0_27, %c0_28, %c0_29] : memref<1x64x16xf32, #tpu.memory_space<vmem>>, vector<1x64x16xf32>
    %41 = vector.shape_cast %40 : vector<1x64x16xf32> to vector<64x16xf32>
    %cst_30 = arith.constant dense<0.000000e+00> : vector<8x16xf32>
    %42 = tpu.matmul %25, %41, %cst_30 {dimension_numbers = #tpu.dot_dimension_numbers<[1], [0], [0], [1], [0, 0, 1, 1], [], []>} : vector<8x64xf32>, vector<64x16xf32>, vector<8x16xf32> -> vector<8x16xf32>
    %c0_31 = arith.constant 0 : index
    %c0_32 = arith.constant 0 : index
    %c0_33 = arith.constant 0 : index
    %c0_34 = arith.constant 0 : index
    %43 = vector.load %arg11[%c0_31, %c0_32, %c0_33, %c0_34] : memref<1x1x8x16xf32, #tpu.memory_space<vmem>>, vector<1x1x8x16xf32>
    %44 = vector.shape_cast %43 : vector<1x1x8x16xf32> to vector<8x16xf32>
    %45 = vector.shape_cast %42 : vector<8x16xf32> to vector<1x1x8x16xf32>
    tpu.vector_store %arg11[%c0_31, %c0_32, %c0_33, %c0_34], %45 {strides = array<i32>} : memref<1x1x8x16xf32, #tpu.memory_space<vmem>>, vector<1x1x8x16xf32>,
    return
  }
  func.func @transform_0(%arg0: i32, %arg1: i32, %arg2: i32) -> (i32, i32, i32) {
    %c0_i32 = arith.constant 0 : i32
    %c0_i32_0 = arith.constant 0 : i32
    return %arg0, %arg2, %c0_i32 : i32, i32, i32
  }
  func.func @transform_1(%arg0: i32, %arg1: i32, %arg2: i32) -> (i32, i32) {
    %c0_i32 = arith.constant 0 : i32
    %c0_i32_0 = arith.constant 0 : i32
    %c0_i32_1 = arith.constant 0 : i32
    return %c0_i32, %c0_i32_0 : i32, i32
  }
  func.func @transform_2(%arg0: i32, %arg1: i32, %arg2: i32) -> (i32, i32) {
    %c0_i32 = arith.constant 0 : i32
    %c0_i32_0 = arith.constant 0 : i32
    %c0_i32_1 = arith.constant 0 : i32
    return %c0_i32, %c0_i32_0 : i32, i32
  }
  func.func @transform_3(%arg0: i32, %arg1: i32, %arg2: i32) -> (i32, i32, i32) {
    %c0_i32 = arith.constant 0 : i32
    %c0_i32_0 = arith.constant 0 : i32
    %c0_i32_1 = arith.constant 0 : i32
    return %arg1, %c0_i32, %c0_i32_0 : i32, i32, i32
  }
  func.func @transform_4(%arg0: i32, %arg1: i32, %arg2: i32) -> (i32, i32, i32) {
    %c0_i32 = arith.constant 0 : i32
    %c0_i32_0 = arith.constant 0 : i32
    %c0_i32_1 = arith.constant 0 : i32
    return %arg1, %c0_i32, %c0_i32_0 : i32, i32, i32
  }
  func.func @transform_5(%arg0: i32, %arg1: i32, %arg2: i32) -> (i32, i32, i32) {
    %c0_i32 = arith.constant 0 : i32
    %c0_i32_0 = arith.constant 0 : i32
    %c0_i32_1 = arith.constant 0 : i32
    return %arg1, %c0_i32, %c0_i32_0 : i32, i32, i32
  }
  func.func @transform_6(%arg0: i32, %arg1: i32, %arg2: i32) -> (i32, i32, i32, i32) {
    %c0_i32 = arith.constant 0 : i32
    %c0_i32_0 = arith.constant 0 : i32
    return %arg0, %arg1, %arg2, %c0_i32 : i32, i32, i32, i32
  }
  func.func @transform_7(%arg0: i32, %arg1: i32, %arg2: i32) -> (i32, i32, i32, i32) {
    %c0_i32 = arith.constant 0 : i32
    %c0_i32_0 = arith.constant 0 : i32
    return %arg0, %arg1, %arg2, %c0_i32 : i32, i32, i32, i32
  }
  func.func @transform_8(%arg0: i32, %arg1: i32, %arg2: i32) -> (i32, i32, i32, i32) {
    %c0_i32 = arith.constant 0 : i32
    %c0_i32_0 = arith.constant 0 : i32
    return %arg0, %arg1, %arg2, %c0_i32 : i32, i32, i32, i32
  }
}

</mosaic_0001>

<llo_original>
// kernel: tpu_custom_call.1
$region0: #{tpu_custom_call.1}
  #allocation0 [shape = 'u32[]', space=smem, size = 0x4, offset = 0x4, fixed_abs, tag = 'smem constant byte address 0x4 - core index']
  #allocation1 [shape = 'u32[144,128]{1,0:T(1,128)}', space=vmem, size = 0x12000, scoped, tag = 'internal scratch']
  %s0 = inlined_call_operand.vmem [shape: f32[2,16,64], index: 0, kind: input, shape index: {}]
  %s1 = inlined_call_operand.vmem [shape: f32[1,64], index: 1, kind: input, shape index: {}]
  %s2 = inlined_call_operand.vmem [shape: f32[1,64], index: 2, kind: input, shape index: {}]
  %s3 = inlined_call_operand.vmem [shape: f32[4,64,16], index: 3, kind: input, shape index: {}]
  %s4 = inlined_call_operand.vmem [shape: f32[4,64,16], index: 4, kind: input, shape index: {}]
  %s5 = inlined_call_operand.vmem [shape: f32[4,64,16], index: 5, kind: input, shape index: {}]
  %s6 = inlined_call_operand.hbm [shape: f32[2,4,16,16], index: 6, kind: output, shape index: {0}]
  %s7 = inlined_call_operand.hbm [shape: f32[2,4,16,16], index: 7, kind: output, shape index: {1}]
  %s8 = inlined_call_operand.hbm [shape: f32[2,4,16,16], index: 8, kind: output, shape index: {2}]
  %9 = xla_tuple %s6, %s7, %s8
  %s10 = sld [smem:[#allocation0]]
  $region73: #{tpu_custom_call.1} parent=0
    _
  %s12 = ssub.s32 1, %s10
  %s13 = scalar_select 0, %s12, %s10
  $region1: #{tpu_custom_call.1} parent=0
    #allocation2 [shape = 'u8[8192]{0}', space=vmem, size = 0x2000, scoped, tag = 'output window, operand 0']
    #allocation3 [shape = 's32[2]{0}', space=sflag, size = 0x8, scoped, tag = 'scoped memory for tpu_custom_call.1']
    #allocation4 [shape = 'u8[8192]{0}', space=vmem, size = 0x2000, scoped, tag = 'output window, operand 1']
    #allocation5 [shape = 's32[2]{0}', space=sflag, size = 0x8, scoped, tag = 'scoped memory for tpu_custom_call.1']
    #allocation6 [shape = 'u8[8192]{0}', space=vmem, size = 0x2000, scoped, tag = 'output window, operand 2']
    %14 = vsyncpa [#allocation3], 0
    %s15 = scalar_lea.sflag [#allocation3], 1
    %16 = vsyncpa %s15, 0
    %17 = vsyncpa [#allocation5], 0
    %s18 = scalar_lea.sflag [#allocation5], 1
    %19 = vsyncpa %s18, 0
    loop: start=0, step=1, limit=18
    $region2: #{tpu_custom_call.1} parent=1 // loop_pre_header
      _
    $region3: #{tpu_custom_call.1} parent=1 // loop_header
      %s21 = sphi 0, %s25
      %p22 = scmp.ge.s32.totalorder %s21, 18
      %s28 = sphi 0, %s47
      %s29 = sphi 0, %s43
      %s30 = sphi 0, %s39
      %s31 = sphi 0, %s28
      %s32 = sphi 0, %s29
      %s33 = sphi 0, %s30
      %s34 = sphi 0, %s31
      %s35 = sphi 0, %s32
      %s36 = sphi 0, %s33
      %s52 = sphi 0, %s54
      %s55 = sphi 0, %s52
      %s56 = sphi 0, %s55
      %s72 = sphi 0, %s56
      %s76 = sphi 0, %s76
      %s78 = sphi 0, %s76
      %s79 = sphi 0, %s78
      %s93 = sphi 0, %s79
      %s97 = sphi 0, %s97
      %s99 = sphi 0, %s97
      %s100 = sphi 0, %s99
      %s114 = sphi 0, %s100
      %s120 = sphi 0, %s122
      %s123 = sphi 0, %s120
      %s124 = sphi 0, %s123
      %s140 = sphi 0, %s124
      %s146 = sphi 0, %s148
      %s149 = sphi 0, %s146
      %s150 = sphi 0, %s149
      %s166 = sphi 0, %s150
      %s172 = sphi 0, %s174
      %s175 = sphi 0, %s172
      %s176 = sphi 0, %s175
      %s192 = sphi 0, %s176
      %s202 = sphi 0, %s204
      %s205 = sphi 0, %s202
      %s206 = sphi 0, %s205
      %s222 = sphi 0, %s206
      %s232 = sphi 0, %s234
      %s235 = sphi 0, %s232
      %s236 = sphi 0, %s235
      %s252 = sphi 0, %s236
      %s262 = sphi 0, %s264
      %s265 = sphi 0, %s262
      %s266 = sphi 0, %s265
      %s282 = sphi 0, %s266
    $region4: #{tpu_custom_call.1} parent=1 // loop_header_branch
      %24 = sbr.rel (%p22) target = $region8
    $region5: #{tpu_custom_call.1} parent=1 // loop_body
      %s26 = ssub.s32 %s21, 1
      %s27 = ssub.s32 %s21, 2
      %s37 = sadd.s32 1, %s30
      %p38 = scmp.ge.s32.totalorder %s37, 2
      %s39 = scalar_select %p38, 0, %s37
      %s40 = sadd.s32 1, %s29
      %s41 = scalar_select %p38, %s40, %s29
      %p42 = scmp.ge.s32.totalorder %s41, 4
      %s43 = scalar_select %p42, 0, %s41
      %s44 = sadd.s32 1, %s28
      %s45 = scalar_select %p42, %s44, %s28
      %p46 = scmp.ge.s32.totalorder %s45, 2
      %s47 = scalar_select %p46, 0, %s45
      %s48 = ssub.s32 %s28, %s47
      %s49 = ssub.s32 %s30, %s39
      %s50 = sor.u32 %s48, %s49
      %p51 = scmp.eq.s32.totalorder %s50, 0
      %s53 = sadd.s32 %s52, 1
      %s54 = scalar_select %p51, %s52, %s53
      %p57 = pneg %p51
      %p58 = scmp.eq.s32.totalorder %s21, 15
      %p59 = por %p57, %p58
      %p60 = scmp.ne.s32.totalorder %s52, %s55
      %p61 = scmp.eq.s32.totalorder %s21, 0
      %p62 = por %p60, %p61
      %p63 = scmp.ne.s32.totalorder %s52, %s55
      %p64 = scmp.eq.s32.totalorder %s26, 15
      %p65 = por %p63, %p64
      %p66 = scmp.ne.s32.totalorder %s55, %s56
      %p67 = scmp.eq.s32.totalorder %s26, 0
      %p68 = por %p66, %p67
      %p69 = scmp.ne.s32.totalorder %s55, %s56
      %p70 = scmp.eq.s32.totalorder %s27, 15
      %p71 = por %p69, %p70
      %p73 = scmp.ne.s32.totalorder %s56, %s72
      %p74 = scmp.eq.s32.totalorder %s27, 0
      %p75 = por %p73, %p74
      %s77 = sadd.s32 %s76, 1
      %p80 = scmp.eq.s32.totalorder %s21, 15
      %p81 = scmp.ne.s32.totalorder %s76, %s78
      %p82 = scmp.eq.s32.totalorder %s21, 0
      %p83 = por %p81, %p82
      %p84 = scmp.ne.s32.totalorder %s76, %s78
      %p85 = scmp.eq.s32.totalorder %s26, 15
      %p86 = por %p84, %p85
      %p87 = scmp.ne.s32.totalorder %s78, %s79
      %p88 = scmp.eq.s32.totalorder %s26, 0
      %p89 = por %p87, %p88
      %p90 = scmp.ne.s32.totalorder %s78, %s79
      %p91 = scmp.eq.s32.totalorder %s27, 15
      %p92 = por %p90, %p91
      %p94 = scmp.ne.s32.totalorder %s79, %s93
      %p95 = scmp.eq.s32.totalorder %s27, 0
      %p96 = por %p94, %p95
      %s98 = sadd.s32 %s97, 1
      %p101 = scmp.eq.s32.totalorder %s21, 15
      %p102 = scmp.ne.s32.totalorder %s97, %s99
      %p103 = scmp.eq.s32.totalorder %s21, 0
      %p104 = por %p102, %p103
      %p105 = scmp.ne.s32.totalorder %s97, %s99
      %p106 = scmp.eq.s32.totalorder %s26, 15
      %p107 = por %p105, %p106
      %p108 = scmp.ne.s32.totalorder %s99, %s100
      %p109 = scmp.eq.s32.totalorder %s26, 0
      %p110 = por %p108, %p109
      %p111 = scmp.ne.s32.totalorder %s99, %s100
      %p112 = scmp.eq.s32.totalorder %s27, 15
      %p113 = por %p111, %p112
      %p115 = scmp.ne.s32.totalorder %s100, %s114
      %p116 = scmp.eq.s32.totalorder %s27, 0
      %p117 = por %p115, %p116
      %s118 = ssub.s32 %s29, %s43
      %p119 = scmp.eq.s32.totalorder %s118, 0
      %s121 = sadd.s32 %s120, 1
      %s122 = scalar_select %p119, %s120, %s121
      %p125 = pneg %p119
      %p126 = scmp.eq.s32.totalorder %s21, 15
      %p127 = por %p125, %p126
      %p128 = scmp.ne.s32.totalorder %s120, %s123
      %p129 = scmp.eq.s32.totalorder %s21, 0
      %p130 = por %p128, %p129
      %p131 = scmp.ne.s32.totalorder %s120, %s123
      %p132 = scmp.eq.s32.totalorder %s26, 15
      %p133 = por %p131, %p132
      %p134 = scmp.ne.s32.totalorder %s123, %s124
      %p135 = scmp.eq.s32.totalorder %s26, 0
      %p136 = por %p134, %p135
      %p137 = scmp.ne.s32.totalorder %s123, %s124
      %p138 = scmp.eq.s32.totalorder %s27, 15
      %p139 = por %p137, %p138
      %p141 = scmp.ne.s32.totalorder %s124, %s140
      %p142 = scmp.eq.s32.totalorder %s27, 0
      %p143 = por %p141, %p142
      %s144 = ssub.s32 %s29, %s43
      %p145 = scmp.eq.s32.totalorder %s144, 0
      %s147 = sadd.s32 %s146, 1
      %s148 = scalar_select %p145, %s146, %s147
      %p151 = pneg %p145
      %p152 = scmp.eq.s32.totalorder %s21, 15
      %p153 = por %p151, %p152
      %p154 = scmp.ne.s32.totalorder %s146, %s149
      %p155 = scmp.eq.s32.totalorder %s21, 0
      %p156 = por %p154, %p155
      %p157 = scmp.ne.s32.totalorder %s146, %s149
      %p158 = scmp.eq.s32.totalorder %s26, 15
      %p159 = por %p157, %p158
      %p160 = scmp.ne.s32.totalorder %s149, %s150
      %p161 = scmp.eq.s32.totalorder %s26, 0
      %p162 = por %p160, %p161
      %p163 = scmp.ne.s32.totalorder %s149, %s150
      %p164 = scmp.eq.s32.totalorder %s27, 15
      %p165 = por %p163, %p164
      %p167 = scmp.ne.s32.totalorder %s150, %s166
      %p168 = scmp.eq.s32.totalorder %s27, 0
      %p169 = por %p167, %p168
      %s170 = ssub.s32 %s29, %s43
      %p171 = scmp.eq.s32.totalorder %s170, 0
      %s173 = sadd.s32 %s172, 1
      %s174 = scalar_select %p171, %s172, %s173
      %p177 = pneg %p171
      %p178 = scmp.eq.s32.totalorder %s21, 15
      %p179 = por %p177, %p178
      %p180 = scmp.ne.s32.totalorder %s172, %s175
      %p181 = scmp.eq.s32.totalorder %s21, 0
      %p182 = por %p180, %p181
      %p183 = scmp.ne.s32.totalorder %s172, %s175
      %p184 = scmp.eq.s32.totalorder %s26, 15
      %p185 = por %p183, %p184
      %p186 = scmp.ne.s32.totalorder %s175, %s176
      %p187 = scmp.eq.s32.totalorder %s26, 0
      %p188 = por %p186, %p187
      %p189 = scmp.ne.s32.totalorder %s175, %s176
      %p190 = scmp.eq.s32.totalorder %s27, 15
      %p191 = por %p189, %p190
      %p193 = scmp.ne.s32.totalorder %s176, %s192
      %p194 = scmp.eq.s32.totalorder %s27, 0
      %p195 = por %p193, %p194
      %s196 = ssub.s32 %s28, %s47
      %s197 = ssub.s32 %s29, %s43
      %s198 = sor.u32 %s196, %s197
      %s199 = ssub.s32 %s30, %s39
      %s200 = sor.u32 %s198, %s199
      %p201 = scmp.eq.s32.totalorder %s200, 0
      %s203 = sadd.s32 %s202, 1
      %s204 = scalar_select %p201, %s202, %s203
      %p207 = pneg %p201
      %p208 = scmp.eq.s32.totalorder %s21, 15
      %p209 = por %p207, %p208
      %p210 = scmp.ne.s32.totalorder %s202, %s205
      %p211 = scmp.eq.s32.totalorder %s21, 0
      %p212 = por %p210, %p211
      %p213 = scmp.ne.s32.totalorder %s202, %s205
      %p214 = scmp.eq.s32.totalorder %s26, 15
      %p215 = por %p213, %p214
      %p216 = scmp.ne.s32.totalorder %s205, %s206
      %p217 = scmp.eq.s32.totalorder %s26, 0
      %p218 = por %p216, %p217
      %p219 = scmp.ne.s32.totalorder %s205, %s206
      %p220 = scmp.eq.s32.totalorder %s27, 15
      %p221 = por %p219, %p220
      %p223 = scmp.ne.s32.totalorder %s206, %s222
      %p224 = scmp.eq.s32.totalorder %s27, 0
      %p225 = por %p223, %p224
      %s226 = ssub.s32 %s28, %s47
      %s227 = ssub.s32 %s29, %s43
      %s228 = sor.u32 %s226, %s227
      %s229 = ssub.s32 %s30, %s39
      %s230 = sor.u32 %s228, %s229
      %p231 = scmp.eq.s32.totalorder %s230, 0
      %s233 = sadd.s32 %s232, 1
      %s234 = scalar_select %p231, %s232, %s233
      %p237 = pneg %p231
      %p238 = scmp.eq.s32.totalorder %s21, 15
      %p239 = por %p237, %p238
      %p240 = scmp.ne.s32.totalorder %s232, %s235
      %p241 = scmp.eq.s32.totalorder %s21, 0
      %p242 = por %p240, %p241
      %p243 = scmp.ne.s32.totalorder %s232, %s235
      %p244 = scmp.eq.s32.totalorder %s26, 15
      %p245 = por %p243, %p244
      %p246 = scmp.ne.s32.totalorder %s235, %s236
      %p247 = scmp.eq.s32.totalorder %s26, 0
      %p248 = por %p246, %p247
      %p249 = scmp.ne.s32.totalorder %s235, %s236
      %p250 = scmp.eq.s32.totalorder %s27, 15
      %p251 = por %p249, %p250
      %p253 = scmp.ne.s32.totalorder %s236, %s252
      %p254 = scmp.eq.s32.totalorder %s27, 0
      %p255 = por %p253, %p254
      %s256 = ssub.s32 %s28, %s47
      %s257 = ssub.s32 %s29, %s43
      %s258 = sor.u32 %s256, %s257
      %s259 = ssub.s32 %s30, %s39
      %s260 = sor.u32 %s258, %s259
      %p261 = scmp.eq.s32.totalorder %s260, 0
      %s263 = sadd.s32 %s262, 1
      %s264 = scalar_select %p261, %s262, %s263
      %p267 = pneg %p261
      %p268 = scmp.eq.s32.totalorder %s21, 15
      %p269 = por %p267, %p268
      %p270 = scmp.ne.s32.totalorder %s262, %s265
      %p271 = scmp.eq.s32.totalorder %s21, 0
      %p272 = por %p270, %p271
      %p273 = scmp.ne.s32.totalorder %s262, %s265
      %p274 = scmp.eq.s32.totalorder %s26, 15
      %p275 = por %p273, %p274
      %p276 = scmp.ne.s32.totalorder %s265, %s266
      %p277 = scmp.eq.s32.totalorder %s26, 0
      %p278 = por %p276, %p277
      %p279 = scmp.ne.s32.totalorder %s265, %s266
      %p280 = scmp.eq.s32.totalorder %s27, 15
      %p281 = por %p279, %p280
      %p283 = scmp.ne.s32.totalorder %s266, %s282
      %p284 = scmp.eq.s32.totalorder %s27, 0
      %p285 = por %p283, %p284
      %p286 = scmp.le.s32.totalorder 1, %s21
      %p287 = scmp.lt.s32.totalorder %s21, 17
      %p288 = pnand %p286, %p287
      %p289 = pneg %p288
      // Predicated region
      $region9: #{tpu_custom_call.1} parent=5 // pred_check
        _
      $region10: #{tpu_custom_call.1} parent=5 // pred_check_branch
        %291 = sbr.rel (%p288) target = $region12
      $region11: #{tpu_custom_call.1} parent=5 // pred_region
        %s292 = ssub.s32 %s21, 1
        // Predicated region
        $region13: #{tpu_custom_call.1} parent=11 // pred_check
          %p293 = pneg %p89
        $region14: #{tpu_custom_call.1} parent=11 // pred_check_branch
          %295 = sbr.rel (%p293) target = $region16
        $region15: #{tpu_custom_call.1} parent=11 // pred_region
          _
        $region16: #{tpu_custom_call.1} parent=11 // pred_fallthru
          _
        // Predicated region
        $region17: #{tpu_custom_call.1} parent=11 // pred_check
          %p296 = pneg %p110
        $region18: #{tpu_custom_call.1} parent=11 // pred_check_branch
          %298 = sbr.rel (%p296) target = $region20
        $region19: #{tpu_custom_call.1} parent=11 // pred_region
          _
        $region20: #{tpu_custom_call.1} parent=11 // pred_fallthru
          _
      $region12: #{tpu_custom_call.1} parent=5 // pred_fallthru
        _
      %p299 = scmp.lt.s32.totalorder %s21, 16
      // Predicated region
      $region21: #{tpu_custom_call.1} parent=5 // pred_check
        %p300 = pneg %p299
      $region22: #{tpu_custom_call.1} parent=5 // pred_check_branch
        %302 = sbr.rel (%p300) target = $region24
      $region23: #{tpu_custom_call.1} parent=5 // pred_region
        // Predicated region
        $region25: #{tpu_custom_call.1} parent=23 // pred_check
          %p303 = pneg %p62
        $region26: #{tpu_custom_call.1} parent=23 // pred_check_branch
          %305 = sbr.rel (%p303) target = $region28
        $region27: #{tpu_custom_call.1} parent=23 // pred_region
          %p306 = scmp.lt.s32.totalorder %s28, 1
          %s307 = scalar_select %p306, %s28, 1
          %p308 = scmp.lt.s32.totalorder %s30, 1
          %s309 = scalar_select %p308, %s30, 1
          %s310 = smul.addr %s307, 2
          %s311 = sadd.s32 %s309, %s310
          %s312 = smul.addr %s311, 8
          %s313 = scalar_lea.vmem %s0, %s312
        $region28: #{tpu_custom_call.1} parent=23 // pred_fallthru
          _
        // Predicated region
        $region29: #{tpu_custom_call.1} parent=23 // pred_check
          %p314 = pneg %p130
        $region30: #{tpu_custom_call.1} parent=23 // pred_check_branch
          %316 = sbr.rel (%p314) target = $region32
        $region31: #{tpu_custom_call.1} parent=23 // pred_region
          %p317 = scmp.lt.s32.totalorder %s29, 3
          %s318 = scalar_select %p317, %s29, 3
          %s319 = smul.addr %s318, 8
          %s320 = smul.addr %s319, 8
          %s321 = scalar_lea.vmem %s3, %s320
        $region32: #{tpu_custom_call.1} parent=23 // pred_fallthru
          _
        // Predicated region
        $region33: #{tpu_custom_call.1} parent=23 // pred_check
          %p322 = pneg %p156
        $region34: #{tpu_custom_call.1} parent=23 // pred_check_branch
          %324 = sbr.rel (%p322) target = $region36
        $region35: #{tpu_custom_call.1} parent=23 // pred_region
          %p325 = scmp.lt.s32.totalorder %s29, 3
          %s326 = scalar_select %p325, %s29, 3
          %s327 = smul.addr %s326, 8
          %s328 = smul.addr %s327, 8
          %s329 = scalar_lea.vmem %s4, %s328
        $region36: #{tpu_custom_call.1} parent=23 // pred_fallthru
          _
        // Predicated region
        $region37: #{tpu_custom_call.1} parent=23 // pred_check
          %p330 = pneg %p182
        $region38: #{tpu_custom_call.1} parent=23 // pred_check_branch
          %332 = sbr.rel (%p330) target = $region40
        $region39: #{tpu_custom_call.1} parent=23 // pred_region
          %p333 = scmp.lt.s32.totalorder %s29, 3
          %s334 = scalar_select %p333, %s29, 3
          %s335 = smul.addr %s334, 8
          %s336 = smul.addr %s335, 8
          %s337 = scalar_lea.vmem %s5, %s336
        $region40: #{tpu_custom_call.1} parent=23 // pred_fallthru
          _
      $region24: #{tpu_custom_call.1} parent=5 // pred_fallthru
        _
      %p338 = scmp.le.s32.totalorder 1, %s21
      %p339 = scmp.lt.s32.totalorder %s21, 17
      %p340 = pnand %p338, %p339
      %p341 = pneg %p340
      // Predicated region
      $region41: #{tpu_custom_call.1} parent=5 // pred_check
        _
      $region42: #{tpu_custom_call.1} parent=5 // pred_check_branch
        %343 = sbr.rel (%p340) target = $region44
      $region43: #{tpu_custom_call.1} parent=5 // pred_region
        %s344 = ssub.s32 %s21, 1
        %p345 = scmp.lt.s32.totalorder %s31, 1
        %s346 = scalar_select %p345, %s31, 1
        %p347 = scmp.lt.s32.totalorder %s33, 1
        %s348 = scalar_select %p347, %s33, 1
        %s349 = smul.addr %s346, 2
        %s350 = sadd.s32 %s348, %s349
        %s351 = smul.addr %s350, 8
        %s352 = scalar_lea.vmem %s0, %s351
        %p353 = pneg %p68
        %p354 = pneg %p65
        %p355 = pneg %p89
        %p356 = pneg %p86
        %p357 = pneg %p110
        %p358 = pneg %p107
        %p359 = scmp.lt.s32.totalorder %s32, 3
        %s360 = scalar_select %p359, %s32, 3
        %s361 = smul.addr %s360, 8
        %s362 = smul.addr %s361, 8
        %s363 = scalar_lea.vmem %s3, %s362
        %p364 = pneg %p136
        %p365 = pneg %p133
        %p366 = scmp.lt.s32.totalorder %s32, 3
        %s367 = scalar_select %p366, %s32, 3
        %s368 = smul.addr %s367, 8
        %s369 = smul.addr %s368, 8
        %s370 = scalar_lea.vmem %s4, %s369
        %p371 = pneg %p162
        %p372 = pneg %p159
        %p373 = scmp.lt.s32.totalorder %s32, 3
        %s374 = scalar_select %p373, %s32, 3
        %s375 = smul.addr %s374, 8
        %s376 = smul.addr %s375, 8
        %s377 = scalar_lea.vmem %s5, %s376
        %p378 = pneg %p188
        %p379 = pneg %p185
        %p380 = pneg %p218
        %p381 = pneg %p215
        %s382 = sand.u32 %s205, 1
        %s383 = scalar_lea.sflag [#allocation3], %s382
        %s384 = sand.u32 %s205, 1
        %s385 = smul.addr %s384, 8
        %s386 = scalar_lea.vmem [#allocation2], %s385
        %p387 = pneg %p248
        %p388 = pneg %p245
        %s389 = sand.u32 %s26, 1
        %s390 = scalar_lea.sflag [#allocation5], %s389
        %s391 = sand.u32 %s235, 1
        %s392 = smul.addr %s391, 8
        %s393 = scalar_lea.vmem [#allocation4], %s392
        %p394 = pneg %p278
        %p395 = pneg %p275
        %s396 = sand.u32 %s26, 1
        %s397 = scalar_lea.sflag [#allocation5], %s396
        %s398 = sand.u32 %s265, 1
        %s399 = smul.addr %s398, 8
        %s400 = scalar_lea.vmem [#allocation6], %s399
        %p401 = scmp.lt.s32.totalorder %s31, 1
        %s402 = scalar_select %p401, %s31, 1
        %p403 = scmp.lt.s32.totalorder %s33, 1
        %s404 = scalar_select %p403, %s33, 1
        %s405 = smul.addr %s402, 2
        %s406 = sadd.s32 %s404, %s405
        %s407 = smul.addr %s406, 8
        %s408 = scalar_lea.vmem %s0, %s407
        %p409 = scmp.lt.s32.totalorder %s32, 3
        %s410 = scalar_select %p409, %s32, 3
        %s411 = smul.addr %s410, 8
        %s412 = smul.addr %s411, 8
        %s413 = scalar_lea.vmem %s3, %s412
        %p414 = scmp.lt.s32.totalorder %s32, 3
        %s415 = scalar_select %p414, %s32, 3
        %s416 = smul.addr %s415, 8
        %s417 = smul.addr %s416, 8
        %s418 = scalar_lea.vmem %s4, %s417
        %p419 = scmp.lt.s32.totalorder %s32, 3
        %s420 = scalar_select %p419, %s32, 3
        %s421 = smul.addr %s420, 8
        %s422 = smul.addr %s421, 8
        %s423 = scalar_lea.vmem %s5, %s422
        %v424 = vld [vmem:[%s408] sm:$0xff]
        %v425 = vld [vmem:[%s1] sm:$0x1]
        %v426 = vld [vmem:[%s2] sm:$0x1]
        %vm427 = vcmask 523264
        %v428 = vsel %vm427, %v424, 0.0
        %429 = vadd.xlane.f32.xlu0 %v428
        %v430 = vpop.xlane.xlu0 %429
        %v431 = vrcp.pop 64.0
        %v432 = vmul.f32 %v430, %v431
        %v433 = vsub.f32 %v424, %v432
        %v434 = vmul.f32 %v433, %v433
        %v435 = vsel %vm427, %v434, 0.0
        %436 = vadd.xlane.f32.xlu0 %v435
        %v437 = vpop.xlane.xlu0 %436
        %v438 = vmul.f32 %v437, %v431
        %v439 = vadd.f32 %v438, 1e-05
        %v440 = vrsqrt.pop %v439
        %v441 = vmul.f32 %v433, %v440
        %v443 = vlaneseq
        %v444 = vshrl.u32 %v443, 7
        %v445 = vsub.s32 0, %v444
        %v446 = vrot.slane %v425, %v445
        %v448 = vmul.f32 %v441, %v446
        %v450 = vlaneseq
        %v451 = vshrl.u32 %v450, 7
        %v452 = vsub.s32 0, %v451
        %v453 = vrot.slane %v426, %v452
        %v455 = vadd.f32 %v448, %v453
        %v456 = vld [vmem:[%s413] sm:$0xff]
        %v457 = vld [vmem:[%s413 + $0x8] sm:$0xff]
        %v458 = vld [vmem:[%s413 + $0x10] sm:$0xff]
        %v459 = vld [vmem:[%s413 + $0x18] sm:$0xff]
        %v460 = vld [vmem:[%s413 + $0x20] sm:$0xff]
        %v461 = vld [vmem:[%s413 + $0x28] sm:$0xff]
        %v462 = vld [vmem:[%s413 + $0x30] sm:$0xff]
        %v463 = vld [vmem:[%s413 + $0x38] sm:$0xff]
        %v465 = vsel %vm427, %v455, 0
        %467 = vmatprep.subr.mxu0 0.0
        %468 = vmatpush1.msra.mxu0 %v456
        %469 = vmatprep.subr.mxu0 0.0
        %470 = vmatpush1.msra.mxu0 %v457
        %471 = vmatprep.subr.mxu0 0.0
        %472 = vmatpush1.msra.mxu0 %v458
        %473 = vmatprep.subr.mxu0 0.0
        %474 = vmatpush1.msra.mxu0 %v459
        %475 = vmatprep.subr.mxu0 0.0
        %476 = vmatpush1.msra.mxu0 %v460
        %477 = vmatprep.subr.mxu0 0.0
        %478 = vmatpush1.msra.mxu0 %v461
        %479 = vmatprep.subr.mxu0 0.0
        %480 = vmatpush1.msra.mxu0 %v462
        %481 = vmatprep.subr.mxu0 0.0
        %482 = vmatpush1.msra.mxu0 %v463
        %483 = vmatprep.subr.mxu0 0.0
        %484 = vmatpush1.msra.mxu0 0.0
        %485 = vmatprep.subr.mxu0 0.0
        %486 = vmatpush1.msra.mxu0 0.0
        %487 = vmatprep.subr.mxu0 0.0
        %488 = vmatpush1.msra.mxu0 0.0
        %489 = vmatprep.subr.mxu0 0.0
        %490 = vmatpush1.msra.mxu0 0.0
        %491 = vmatprep.subr.mxu0 0.0
        %492 = vmatpush1.msra.mxu0 0.0
        %493 = vmatprep.subr.mxu0 0.0
        %494 = vmatpush1.msra.mxu0 0.0
        %495 = vmatprep.subr.mxu0 0.0
        %496 = vmatpush1.msra.mxu0 0.0
        %497 = vmatprep.subr.mxu0 0.0
        %498 = vmatpush1.msra.mxu0 0.0
        %499 = vmatprep.subr.mxu0 0.0
        %500 = vmatpush1.msra.mxu0 0.0
        %501 = vmatprep.subr.mxu0 0.0
        %502 = vmatpush1.msra.mxu0 0.0
        %503 = vmatprep.subr.mxu0 0.0
        %504 = vmatpush1.msra.mxu0 0.0
        %505 = vmatprep.subr.mxu0 0.0
        %506 = vmatpush1.msra.mxu0 0.0
        %507 = vmatprep.subr.mxu0 0.0
        %508 = vmatpush1.msra.mxu0 0.0
        %509 = vmatprep.subr.mxu0 0.0
        %510 = vmatpush1.msra.mxu0 0.0
        %511 = vmatprep.subr.mxu0 0.0
        %512 = vmatpush1.msra.mxu0 0.0
        %513 = vmatprep.subr.mxu0 0.0
        %514 = vmatpush1.msra.mxu0 0.0
        %515 = vmatprep.subr.mxu0 0.0
        %516 = vmatpush1.msra.mxu0 0.0
        %517 = vmatprep.subr.mxu0 0.0
        %518 = vmatpush1.msra.mxu0 0.0
        %519 = vmatprep.subr.mxu0 0.0
        %520 = vmatpush1.msra.mxu0 0.0
        %521 = vmatprep.subr.mxu0 0.0
        %522 = vmatpush1.msra.mxu0 0.0
        %523 = vmatprep.subr.mxu0 0.0
        %524 = vmatpush1.msra.mxu0 0.0
        %525 = vmatprep.subr.mxu0 0.0
        %526 = vmatpush1.msra.mxu0 0.0
        %527 = vmatprep.subr.mxu0 0.0
        %528 = vmatpush1.msra.mxu0 0.0
        %529 = vmatprep.subr.mxu0 0.0
        %530 = vmatpush1.msra.mxu0 0.0
        %531 = vmatprep.mubr.f32.mxu0 0.0
        %532 = vmatmul.mubr.f32.gmra.mrb[0].mxu0 %v465
        %v533 = vpop.f32.mrb[0].mxu0
        %v534 = vadd.f32 0.0, %v533
        %v535 = vpop.f32.mrb[0].mxu0
        %536 = vdwg.mxu0
        %v537 = vmul.f32 %v534, 0.25
        %vm538 = vcmask 130048
        %539 = vst.msk [vmem:[%s386] sm:$0xff] %vm538, %v537
        %v540 = vld [vmem:[%s418] sm:$0xff]
        %v541 = vld [vmem:[%s418 + $0x8] sm:$0xff]
        %v542 = vld [vmem:[%s418 + $0x10] sm:$0xff]
        %v543 = vld [vmem:[%s418 + $0x18] sm:$0xff]
        %v544 = vld [vmem:[%s418 + $0x20] sm:$0xff]
        %v545 = vld [vmem:[%s418 + $0x28] sm:$0xff]
        %v546 = vld [vmem:[%s418 + $0x30] sm:$0xff]
        %v547 = vld [vmem:[%s418 + $0x38] sm:$0xff]
        %548 = vmatprep.subr.mxu0 0.0
        %549 = vmatpush1.msra.mxu0 %v540
        %550 = vmatprep.subr.mxu0 0.0
        %551 = vmatpush1.msra.mxu0 %v541
        %552 = vmatprep.subr.mxu0 0.0
        %553 = vmatpush1.msra.mxu0 %v542
        %554 = vmatprep.subr.mxu0 0.0
        %555 = vmatpush1.msra.mxu0 %v543
        %556 = vmatprep.subr.mxu0 0.0
        %557 = vmatpush1.msra.mxu0 %v544
        %558 = vmatprep.subr.mxu0 0.0
        %559 = vmatpush1.msra.mxu0 %v545
        %560 = vmatprep.subr.mxu0 0.0
        %561 = vmatpush1.msra.mxu0 %v546
        %562 = vmatprep.subr.mxu0 0.0
        %563 = vmatpush1.msra.mxu0 %v547
        %564 = vmatprep.subr.mxu0 0.0
        %565 = vmatpush1.msra.mxu0 0.0
        %566 = vmatprep.subr.mxu0 0.0
        %567 = vmatpush1.msra.mxu0 0.0
        %568 = vmatprep.subr.mxu0 0.0
        %569 = vmatpush1.msra.mxu0 0.0
        %570 = vmatprep.subr.mxu0 0.0
        %571 = vmatpush1.msra.mxu0 0.0
        %572 = vmatprep.subr.mxu0 0.0
        %573 = vmatpush1.msra.mxu0 0.0
        %574 = vmatprep.subr.mxu0 0.0
        %575 = vmatpush1.msra.mxu0 0.0
        %576 = vmatprep.subr.mxu0 0.0
        %577 = vmatpush1.msra.mxu0 0.0
        %578 = vmatprep.subr.mxu0 0.0
        %579 = vmatpush1.msra.mxu0 0.0
        %580 = vmatprep.subr.mxu0 0.0
        %581 = vmatpush1.msra.mxu0 0.0
        %582 = vmatprep.subr.mxu0 0.0
        %583 = vmatpush1.msra.mxu0 0.0
        %584 = vmatprep.subr.mxu0 0.0
        %585 = vmatpush1.msra.mxu0 0.0
        %586 = vmatprep.subr.mxu0 0.0
        %587 = vmatpush1.msra.mxu0 0.0
        %588 = vmatprep.subr.mxu0 0.0
        %589 = vmatpush1.msra.mxu0 0.0
        %590 = vmatprep.subr.mxu0 0.0
        %591 = vmatpush1.msra.mxu0 0.0
        %592 = vmatprep.subr.mxu0 0.0
        %593 = vmatpush1.msra.mxu0 0.0
        %594 = vmatprep.subr.mxu0 0.0
        %595 = vmatpush1.msra.mxu0 0.0
        %596 = vmatprep.subr.mxu0 0.0
        %597 = vmatpush1.msra.mxu0 0.0
        %598 = vmatprep.subr.mxu0 0.0
        %599 = vmatpush1.msra.mxu0 0.0
        %600 = vmatprep.subr.mxu0 0.0
        %601 = vmatpush1.msra.mxu0 0.0
        %602 = vmatprep.subr.mxu0 0.0
        %603 = vmatpush1.msra.mxu0 0.0
        %604 = vmatprep.subr.mxu0 0.0
        %605 = vmatpush1.msra.mxu0 0.0
        %606 = vmatprep.subr.mxu0 0.0
        %607 = vmatpush1.msra.mxu0 0.0
        %608 = vmatprep.subr.mxu0 0.0
        %609 = vmatpush1.msra.mxu0 0.0
        %610 = vmatprep.subr.mxu0 0.0
        %611 = vmatpush1.msra.mxu0 0.0
        %612 = vmatprep.mubr.f32.mxu0 0.0
        %613 = vmatmul.mubr.f32.gmra.mrb[0].mxu0 %v465
        %v614 = vpop.f32.mrb[0].mxu0
        %v615 = vadd.f32 0.0, %v614
        %v616 = vpop.f32.mrb[0].mxu0
        %617 = vdwg.mxu0
        %618 = vst.msk [vmem:[%s393] sm:$0xff] %vm538, %v615
        %v619 = vld [vmem:[%s423] sm:$0xff]
        %v620 = vld [vmem:[%s423 + $0x8] sm:$0xff]
        %v621 = vld [vmem:[%s423 + $0x10] sm:$0xff]
        %v622 = vld [vmem:[%s423 + $0x18] sm:$0xff]
        %v623 = vld [vmem:[%s423 + $0x20] sm:$0xff]
        %v624 = vld [vmem:[%s423 + $0x28] sm:$0xff]
        %v625 = vld [vmem:[%s423 + $0x30] sm:$0xff]
        %v626 = vld [vmem:[%s423 + $0x38] sm:$0xff]
        %627 = vmatprep.subr.mxu0 0.0
        %628 = vmatpush1.msra.mxu0 %v619
        %629 = vmatprep.subr.mxu0 0.0
        %630 = vmatpush1.msra.mxu0 %v620
        %631 = vmatprep.subr.mxu0 0.0
        %632 = vmatpush1.msra.mxu0 %v621
        %633 = vmatprep.subr.mxu0 0.0
        %634 = vmatpush1.msra.mxu0 %v622
        %635 = vmatprep.subr.mxu0 0.0
        %636 = vmatpush1.msra.mxu0 %v623
        %637 = vmatprep.subr.mxu0 0.0
        %638 = vmatpush1.msra.mxu0 %v624
        %639 = vmatprep.subr.mxu0 0.0
        %640 = vmatpush1.msra.mxu0 %v625
        %641 = vmatprep.subr.mxu0 0.0
        %642 = vmatpush1.msra.mxu0 %v626
        %643 = vmatprep.subr.mxu0 0.0
        %644 = vmatpush1.msra.mxu0 0.0
        %645 = vmatprep.subr.mxu0 0.0
        %646 = vmatpush1.msra.mxu0 0.0
        %647 = vmatprep.subr.mxu0 0.0
        %648 = vmatpush1.msra.mxu0 0.0
        %649 = vmatprep.subr.mxu0 0.0
        %650 = vmatpush1.msra.mxu0 0.0
        %651 = vmatprep.subr.mxu0 0.0
        %652 = vmatpush1.msra.mxu0 0.0
        %653 = vmatprep.subr.mxu0 0.0
        %654 = vmatpush1.msra.mxu0 0.0
        %655 = vmatprep.subr.mxu0 0.0
        %656 = vmatpush1.msra.mxu0 0.0
        %657 = vmatprep.subr.mxu0 0.0
        %658 = vmatpush1.msra.mxu0 0.0
        %659 = vmatprep.subr.mxu0 0.0
        %660 = vmatpush1.msra.mxu0 0.0
        %661 = vmatprep.subr.mxu0 0.0
        %662 = vmatpush1.msra.mxu0 0.0
        %663 = vmatprep.subr.mxu0 0.0
        %664 = vmatpush1.msra.mxu0 0.0
        %665 = vmatprep.subr.mxu0 0.0
        %666 = vmatpush1.msra.mxu0 0.0
        %667 = vmatprep.subr.mxu0 0.0
        %668 = vmatpush1.msra.mxu0 0.0
        %669 = vmatprep.subr.mxu0 0.0
        %670 = vmatpush1.msra.mxu0 0.0
        %671 = vmatprep.subr.mxu0 0.0
        %672 = vmatpush1.msra.mxu0 0.0
        %673 = vmatprep.subr.mxu0 0.0
        %674 = vmatpush1.msra.mxu0 0.0
        %675 = vmatprep.subr.mxu0 0.0
        %676 = vmatpush1.msra.mxu0 0.0
        %677 = vmatprep.subr.mxu0 0.0
        %678 = vmatpush1.msra.mxu0 0.0
        %679 = vmatprep.subr.mxu0 0.0
        %680 = vmatpush1.msra.mxu0 0.0
        %681 = vmatprep.subr.mxu0 0.0
        %682 = vmatpush1.msra.mxu0 0.0
        %683 = vmatprep.subr.mxu0 0.0
        %684 = vmatpush1.msra.mxu0 0.0
        %685 = vmatprep.subr.mxu0 0.0
        %686 = vmatpush1.msra.mxu0 0.0
        %687 = vmatprep.subr.mxu0 0.0
        %688 = vmatpush1.msra.mxu0 0.0
        %689 = vmatprep.subr.mxu0 0.0
        %690 = vmatpush1.msra.mxu0 0.0
        %691 = vmatprep.mubr.f32.mxu0 0.0
        %692 = vmatmul.mubr.f32.gmra.mrb[0].mxu0 %v465
        %v693 = vpop.f32.mrb[0].mxu0
        %v694 = vadd.f32 0.0, %v693
        %v695 = vpop.f32.mrb[0].mxu0
        %696 = vdwg.mxu0
        %697 = vst.msk [vmem:[%s400] sm:$0xff] %vm538, %v694
        %s698 = sand.u32 %s205, 1
        %s699 = scalar_lea.sflag [#allocation3], %s698
        %s700 = sand.u32 %s205, 1
        %s701 = smul.addr %s700, 8
        %s702 = scalar_lea.vmem [#allocation2], %s701
        %s703 = sand.u32 %s26, 1
        %s704 = scalar_lea.sflag [#allocation5], %s703
        %s705 = sand.u32 %s235, 1
        %s706 = smul.addr %s705, 8
        %s707 = scalar_lea.vmem [#allocation4], %s706
        %s708 = sand.u32 %s26, 1
        %s709 = scalar_lea.sflag [#allocation5], %s708
        %s710 = sand.u32 %s265, 1
        %s711 = smul.addr %s710, 8
        %s712 = scalar_lea.vmem [#allocation6], %s711
        // Predicated region
        $region45: #{tpu_custom_call.1} parent=43 // pred_check
          %p713 = pneg %p215
        $region46: #{tpu_custom_call.1} parent=43 // pred_check_branch
          %715 = sbr.rel (%p713) target = $region48
        $region47: #{tpu_custom_call.1} parent=43 // pred_region
          %s717 = ssub.s32 128, 128
          %718 = vsyncadd %s699, %s717
          %s719 = smul.addr %s32, 2
          %s720 = sadd.s32 %s33, %s719
          %s721 = smul.addr %s31, 8
          %s722 = sadd.s32 %s720, %s721
          %s723 = smul.addr %s722, 128
          %s724 = scalar_lea.hbm %s6, %s723
          %s726 = sshll.u32 %s702, 4
          %s727 = int_to_ptr.vmem [resolvable:$true] %s726
          %729 = dma.vmem_to_hbm [thread:$0]  %s727, 128, %s724, %s699
        $region48: #{tpu_custom_call.1} parent=43 // pred_fallthru
          _
        // Predicated region
        $region49: #{tpu_custom_call.1} parent=43 // pred_check
          %p730 = pneg %p245
        $region50: #{tpu_custom_call.1} parent=43 // pred_check_branch
          %732 = sbr.rel (%p730) target = $region52
        $region51: #{tpu_custom_call.1} parent=43 // pred_region
          %s734 = ssub.s32 128, 128
          %735 = vsyncadd %s704, %s734
          %s736 = smul.addr %s32, 2
          %s737 = sadd.s32 %s33, %s736
          %s738 = smul.addr %s31, 8
          %s739 = sadd.s32 %s737, %s738
          %s740 = smul.addr %s739, 128
          %s741 = scalar_lea.hbm %s7, %s740
          %s743 = sshll.u32 %s707, 4
          %s744 = int_to_ptr.vmem [resolvable:$true] %s743
          %746 = dma.vmem_to_hbm [thread:$0]  %s744, 128, %s741, %s704
        $region52: #{tpu_custom_call.1} parent=43 // pred_fallthru
          _
        // Predicated region
        $region53: #{tpu_custom_call.1} parent=43 // pred_check
          %p747 = pneg %p275
        $region54: #{tpu_custom_call.1} parent=43 // pred_check_branch
          %749 = sbr.rel (%p747) target = $region56
        $region55: #{tpu_custom_call.1} parent=43 // pred_region
          %s751 = ssub.s32 128, 128
          %752 = vsyncadd %s709, %s751
          %s753 = smul.addr %s32, 2
          %s754 = sadd.s32 %s33, %s753
          %s755 = smul.addr %s31, 8
          %s756 = sadd.s32 %s754, %s755
          %s757 = smul.addr %s756, 128
          %s758 = scalar_lea.hbm %s8, %s757
          %s760 = sshll.u32 %s712, 4
          %s761 = int_to_ptr.vmem [resolvable:$true] %s760
          %763 = dma.vmem_to_hbm [thread:$0]  %s761, 128, %s758, %s709
        $region56: #{tpu_custom_call.1} parent=43 // pred_fallthru
          _
      $region44: #{tpu_custom_call.1} parent=5 // pred_fallthru
        _
      %p764 = scmp.le.s32.totalorder 2, %s21
      // Predicated region
      $region57: #{tpu_custom_call.1} parent=5 // pred_check
        %p765 = pneg %p764
      $region58: #{tpu_custom_call.1} parent=5 // pred_check_branch
        %767 = sbr.rel (%p765) target = $region60
      $region59: #{tpu_custom_call.1} parent=5 // pred_region
        %s768 = ssub.s32 %s21, 2
        // Predicated region
        $region61: #{tpu_custom_call.1} parent=59 // pred_check
          %p769 = pneg %p221
        $region62: #{tpu_custom_call.1} parent=59 // pred_check_branch
          %771 = sbr.rel (%p769) target = $region64
        $region63: #{tpu_custom_call.1} parent=59 // pred_region
          %s772 = sand.u32 %s206, 1
          %s773 = scalar_lea.sflag [#allocation3], %s772
          %s774 = sand.u32 %s206, 1
          %s775 = smul.addr %s774, 8
          %s776 = scalar_lea.vmem [#allocation2], %s775
          %777 = dma.done %s773, 128
        $region64: #{tpu_custom_call.1} parent=59 // pred_fallthru
          _
        // Predicated region
        $region65: #{tpu_custom_call.1} parent=59 // pred_check
          %p778 = pneg %p251
        $region66: #{tpu_custom_call.1} parent=59 // pred_check_branch
          %780 = sbr.rel (%p778) target = $region68
        $region67: #{tpu_custom_call.1} parent=59 // pred_region
          %s781 = sand.u32 %s27, 1
          %s782 = scalar_lea.sflag [#allocation5], %s781
          %s783 = sand.u32 %s236, 1
          %s784 = smul.addr %s783, 8
          %s785 = scalar_lea.vmem [#allocation4], %s784
          %786 = dma.done %s782, 128
        $region68: #{tpu_custom_call.1} parent=59 // pred_fallthru
          _
        // Predicated region
        $region69: #{tpu_custom_call.1} parent=59 // pred_check
          %p787 = pneg %p281
        $region70: #{tpu_custom_call.1} parent=59 // pred_check_branch
          %789 = sbr.rel (%p787) target = $region72
        $region71: #{tpu_custom_call.1} parent=59 // pred_region
          %s790 = sand.u32 %s27, 1
          %s791 = scalar_lea.sflag [#allocation5], %s790
          %s792 = sand.u32 %s266, 1
          %s793 = smul.addr %s792, 8
          %s794 = scalar_lea.vmem [#allocation6], %s793
          %795 = dma.done %s791, 128
        $region72: #{tpu_custom_call.1} parent=59 // pred_fallthru
          _
      $region60: #{tpu_custom_call.1} parent=5 // pred_fallthru
        _
    $region6: #{tpu_custom_call.1} parent=1 // loop_footer
      %s25 = sadd.s32 1, %s21
    $region7: #{tpu_custom_call.1} parent=1 // loop_footer_branch
      %20 = sbr.rel target = $region3
    $region8: #{tpu_custom_call.1} parent=1 // loop_exit
      _
    %796 = vsyncpa [#allocation3], 1
    %s797 = scalar_lea.sflag [#allocation3], 1
    %798 = vsyncpa %s797, 1
    %799 = vsyncpa [#allocation5], 1
    %s800 = scalar_lea.sflag [#allocation5], 1
    %801 = vsyncpa %s800, 1

</llo_original>
